<compile_context>
chip_gen: v5e
topology: v5e:2x2
jax: 0.10.0
libtpu: 0.0.40
codegen_flags: <defaults>
</compile_context>

<pallas_src>
import math

import jax
import jax.numpy as jnp
import numpy as np
from jax.experimental import pallas as pl
from jax.experimental.pallas import tpu as pltpu


# ---------------------------------------------------------------------------
# align_corners=True linear-interpolation matrix along one axis (host side).
# ---------------------------------------------------------------------------
def _interp_matrix(out_size, in_size):
    if out_size <= 1 or in_size <= 1:
        ratio = 0.0
    else:
        ratio = (in_size - 1) / (out_size - 1)
    src = jnp.arange(out_size, dtype=jnp.float32) * jnp.float32(ratio)
    lo = jnp.clip(jnp.floor(src), 0, in_size - 1).astype(jnp.int32)
    hi = jnp.minimum(lo + 1, in_size - 1).astype(jnp.int32)
    frac = src - lo.astype(jnp.float32)
    a = jnp.zeros((out_size, in_size), jnp.float32)
    a = a.at[jnp.arange(out_size), lo].add(1.0 - frac)
    a = a.at[jnp.arange(out_size), hi].add(frac)
    return a


# ---------------------------------------------------------------------------
# Pallas kernel: two MXU matmuls + bias per (image, output-row tile).
# ---------------------------------------------------------------------------
def _updown_kernel(x_ref, ah_ref, m_ref, b_ref, o_ref):
    # x_ref : (1, H, W*Cin)      image, channels-last, (W,C) merged into lanes
    # ah_ref: (TH, H)            row tile of the H-interpolation matrix
    # m_ref : (W*Cin, Wo*Cout)   fused W-interpolation (x) 1x1-conv matrix
    # b_ref : (1, Wo*Cout)       conv bias tiled along Wo (f32)
    # o_ref : (1, TH, Wo*Cout)   output row tile, lane-dense store
    x2 = x_ref[0]                                                      # (H, W*Cin)
    t = jnp.dot(ah_ref[...], x2, preferred_element_type=jnp.float32)   # H interp
    t = t.astype(m_ref.dtype)
    y = jnp.dot(t, m_ref[...], preferred_element_type=jnp.float32)     # W interp + conv
    y = y + b_ref[...]
    o_ref[0] = y.astype(o_ref.dtype)


# ---------------------------------------------------------------------------
# Wrapper: NCHW in / NCHW out, exactly like the PyTorch module.
# ---------------------------------------------------------------------------
def updown_block_2d(x_nchw, conv_weight, conv_bias, mode, enabled=True):
    if mode not in ("up", "down"):
        raise ValueError(f"{mode} not supported")

    n, cin, h, w = x_nchw.shape
    cout = conv_weight.shape[0]
    out_dtype = x_nchw.dtype
    cdt = jnp.bfloat16 if x_nchw.dtype == jnp.bfloat16 else jnp.float32

    if enabled:
        scale = 2.0 if mode == "up" else 0.5
        ho = int(math.floor(h * scale))
        wo = int(math.floor(w * scale))
        ah = _interp_matrix(ho, h)                       # (Ho, H)
        aw = _interp_matrix(wo, w)                       # (Wo, W)
    else:                                                # nn.Identity interpolation
        ho, wo = h, w
        ah = jnp.eye(h, dtype=jnp.float32)
        aw = jnp.eye(w, dtype=jnp.float32)

    wc = conv_weight[:, :, 0, 0].astype(jnp.float32).T               # (Cin, Cout)
    m = jnp.kron(aw.T, wc).astype(cdt)                               # (W*Cin, Wo*Cout)
    b_row = jnp.tile(conv_bias.astype(jnp.float32).reshape(1, cout), (1, wo))

    # channels-last with (W, C) merged into the lane dim (interface glue).
    x2 = jnp.transpose(x_nchw, (0, 2, 3, 1)).reshape(n, h, w * cin).astype(cdt)
    ah = ah.astype(cdt)

    th = ho if ho <= 256 else 256                        # output-row tile (mult of 8)
    grid = (n, pl.cdiv(ho, th))

    out = pl.pallas_call(
        _updown_kernel,
        out_shape=jax.ShapeDtypeStruct((n, ho, wo * cout), out_dtype),
        grid_spec=pltpu.PrefetchScalarGridSpec(
            num_scalar_prefetch=0,
            grid=grid,
            in_specs=[
                pl.BlockSpec((1, h, w * cin), lambda nb, i: (nb, 0, 0)),
                pl.BlockSpec((th, h), lambda nb, i: (i, 0)),
                pl.BlockSpec((w * cin, wo * cout), lambda nb, i: (0, 0)),
                pl.BlockSpec((1, wo * cout), lambda nb, i: (0, 0)),
            ],
            out_specs=pl.BlockSpec((1, th, wo * cout),
                                   lambda nb, i: (nb, i, 0)),
        ),
        compiler_params=pltpu.CompilerParams(
            dimension_semantics=("parallel", "parallel"),
            vmem_limit_bytes=48 * 1024 * 1024),
    )(x2, ah, m, b_row)

    out = out.reshape(n, ho, wo, cout)
    return jnp.transpose(out, (0, 3, 1, 2))              # back to NCHW (glue)


# ---------------------------------------------------------------------------
# Pure-JAX reference in the module's literal op order (for validation).
# ---------------------------------------------------------------------------
def reference(x_nchw, conv_weight, conv_bias, mode, enabled=True):
    x = jnp.transpose(x_nchw, (0, 2, 3, 1)).astype(jnp.float32)      # NHWC
    wc = conv_weight[:, :, 0, 0].astype(jnp.float32).T               # (Cin, Cout)

    def conv(z):
        return z @ wc + conv_bias.astype(jnp.float32)

    def interp(z):
        if not enabled:
            return z
        _, h_, w_, _ = z.shape
        s = 2.0 if mode == "up" else 0.5
        ho_, wo_ = int(math.floor(h_ * s)), int(math.floor(w_ * s))
        ahm = _interp_matrix(ho_, h_)
        awm = _interp_matrix(wo_, w_)
        z = jnp.einsum("oh,nhwc->nowc", ahm, z)
        z = jnp.einsum("pw,nowc->nopc", awm, z)
        return z

    y = conv(interp(x)) if mode == "up" else interp(conv(x))
    return jnp.transpose(y, (0, 3, 1, 2))


# ---------------------------------------------------------------------------
if __name__ == "__main__":
    N, CIN, COUT, H, W = 2, 4, 8, 16, 16

    key = jax.random.PRNGKey(0)
    kx, kw, kb = jax.random.split(key, 3)
    x = jax.random.normal(kx, (N, CIN, H, W), jnp.float32)
    # Conv2d(in, out, kernel_size=1): weight (out, in, 1, 1), bias (out,)
    conv_weight = 0.1 * jax.random.normal(kw, (COUT, CIN, 1, 1), jnp.float32)
    conv_bias = 0.1 * jax.random.normal(kb, (COUT,), jnp.float32)

    # f32 runs: strict check against the literal-order reference.
    for mode, enabled in (("up", True), ("down", True), ("up", False)):
        out = jax.block_until_ready(
            updown_block_2d(x, conv_weight, conv_bias, mode, enabled=enabled))
        ref = jax.block_until_ready(
            reference(x, conv_weight, conv_bias, mode, enabled=enabled))
        if out.shape != ref.shape:
            raise AssertionError(
                f"shape mismatch mode={mode} enabled={enabled}: "
                f"{out.shape} vs {ref.shape}")
        if not np.allclose(np.asarray(out), np.asarray(ref),
                           atol=2e-3, rtol=2e-3):
            raise AssertionError(f"mismatch for mode={mode} enabled={enabled}")

    # bf16 smoke run (bf16 operands stay bf16 on the MXU); loose tolerance.
    out_bf = jax.block_until_ready(
        updown_block_2d(x.astype(jnp.bfloat16),
                        conv_weight.astype(jnp.bfloat16),
                        conv_bias.astype(jnp.bfloat16), "up", enabled=True))
    ref_up = jax.block_until_ready(
        reference(x, conv_weight, conv_bias, "up", enabled=True))
    if not np.allclose(np.asarray(out_bf.astype(jnp.float32)),
                       np.asarray(ref_up), atol=0.25, rtol=0.1):
        raise AssertionError("bf16 mismatch for mode=up")

    print("KERNEL_OK")
</pallas_src>

<mosaic_0001>
module attributes {stable_mosaic.version = 11 : i64} {
  func.func @_updown_kernel(%arg0: i32, %arg1: i32, %arg2: memref<1x16x64xf32, #tpu.memory_space<vmem>>, %arg3: memref<32x16xf32, #tpu.memory_space<vmem>>, %arg4: memref<64x256xf32, #tpu.memory_space<vmem>>, %arg5: memref<1x256xf32, #tpu.memory_space<vmem>>, %arg6: memref<1x32x256xf32, #tpu.memory_space<vmem>>) attributes {dimension_semantics = [#tpu.dimension_semantics<parallel>, #tpu.dimension_semantics<parallel>], iteration_bounds = array<i64: 2, 1>, scalar_prefetch = 0 : i64, scratch_operands = 0 : i64, tpu.core_type = #tpu.core_type<tc>, window_params = [{transform_indices = @transform_0, window_bounds = array<i64: 1, 16, 64>}, {transform_indices = @transform_1, window_bounds = array<i64: 32, 16>}, {pipeline_mode = #tpu.pipeline_mode<synchronous>, transform_indices = @transform_2, window_bounds = array<i64: 64, 256>}, {pipeline_mode = #tpu.pipeline_mode<synchronous>, transform_indices = @transform_3, window_bounds = array<i64: 1, 256>}, {transform_indices = @transform_4, window_bounds = array<i64: 1, 32, 256>}]} {
    %c0 = arith.constant 0 : index
    %c0_0 = arith.constant 0 : index
    %c0_1 = arith.constant 0 : index
    %0 = vector.load %arg2[%c0, %c0_0, %c0_1] : memref<1x16x64xf32, #tpu.memory_space<vmem>>, vector<1x16x64xf32>
    %1 = vector.shape_cast %0 : vector<1x16x64xf32> to vector<16x64xf32>
    %c0_2 = arith.constant 0 : index
    %c0_3 = arith.constant 0 : index
    %2 = vector.load %arg3[%c0_2, %c0_3] : memref<32x16xf32, #tpu.memory_space<vmem>>, vector<32x16xf32>
    %cst = arith.constant dense<0.000000e+00> : vector<32x64xf32>
    %3 = tpu.matmul %2, %1, %cst {dimension_numbers = #tpu.dot_dimension_numbers<[1], [0], [0], [1], [0, 0, 1, 1], [], []>} : vector<32x16xf32>, vector<16x64xf32>, vector<32x64xf32> -> vector<32x64xf32>
    %c0_4 = arith.constant 0 : index
    %c0_5 = arith.constant 0 : index
    %4 = vector.load %arg4[%c0_4, %c0_5] : memref<64x256xf32, #tpu.memory_space<vmem>>, vector<64x256xf32>
    %cst_6 = arith.constant dense<0.000000e+00> : vector<32x256xf32>
    %5 = tpu.matmul %3, %4, %cst_6 {dimension_numbers = #tpu.dot_dimension_numbers<[1], [0], [0], [1], [0, 0, 1, 1], [], []>} : vector<32x64xf32>, vector<64x256xf32>, vector<32x256xf32> -> vector<32x256xf32>
    %c0_7 = arith.constant 0 : index
    %c0_8 = arith.constant 0 : index
    %6 = vector.load %arg5[%c0_7, %c0_8] : memref<1x256xf32, #tpu.memory_space<vmem>>, vector<1x256xf32>
    %7 = vector.broadcast %6 : vector<1x256xf32> to vector<32x256xf32>
    %8 = arith.addf %5, %7 : vector<32x256xf32>
    %c0_9 = arith.constant 0 : index
    %c0_10 = arith.constant 0 : index
    %c0_11 = arith.constant 0 : index
    %9 = vector.load %arg6[%c0_9, %c0_10, %c0_11] : memref<1x32x256xf32, #tpu.memory_space<vmem>>, vector<1x32x256xf32>
    %10 = vector.shape_cast %9 : vector<1x32x256xf32> to vector<32x256xf32>
    %11 = vector.shape_cast %8 : vector<32x256xf32> to vector<1x32x256xf32>
    tpu.vector_store %arg6[%c0_9, %c0_10, %c0_11], %11 {strides = array<i32>} : memref<1x32x256xf32, #tpu.memory_space<vmem>>, vector<1x32x256xf32>,
    return
  }
  func.func @transform_0(%arg0: i32, %arg1: i32) -> (i32, i32, i32) {
    %c0_i32 = arith.constant 0 : i32
    %c0_i32_0 = arith.constant 0 : i32
    %c0_i32_1 = arith.constant 0 : i32
    return %arg0, %c0_i32, %c0_i32_0 : i32, i32, i32
  }
  func.func @transform_1(%arg0: i32, %arg1: i32) -> (i32, i32) {
    %c0_i32 = arith.constant 0 : i32
    %c0_i32_0 = arith.constant 0 : i32
    return %arg1, %c0_i32 : i32, i32
  }
  func.func @transform_2(%arg0: i32, %arg1: i32) -> (i32, i32) {
    %c0_i32 = arith.constant 0 : i32
    %c0_i32_0 = arith.constant 0 : i32
    %c0_i32_1 = arith.constant 0 : i32
    return %c0_i32, %c0_i32_0 : i32, i32
  }
  func.func @transform_3(%arg0: i32, %arg1: i32) -> (i32, i32) {
    %c0_i32 = arith.constant 0 : i32
    %c0_i32_0 = arith.constant 0 : i32
    %c0_i32_1 = arith.constant 0 : i32
    return %c0_i32, %c0_i32_0 : i32, i32
  }
  func.func @transform_4(%arg0: i32, %arg1: i32) -> (i32, i32, i32) {
    %c0_i32 = arith.constant 0 : i32
    %c0_i32_0 = arith.constant 0 : i32
    return %arg0, %arg1, %c0_i32 : i32, i32, i32
  }
}

</mosaic_0001>

<llo_original>
// kernel: tpu_custom_call.1
$region0: #{tpu_custom_call.1}
  #allocation0 [shape = 'u32[]', space=smem, size = 0x4, offset = 0x4, fixed_abs, tag = 'smem constant byte address 0x4 - core index']
  #allocation1 [shape = 'u32[72,128]{1,0:T(1,128)}', space=vmem, size = 0x9000, scoped, tag = 'internal scratch']
  %s0 = inlined_call_operand.vmem [shape: f32[2,16,64], index: 0, kind: input, shape index: {}]
  %s1 = inlined_call_operand.vmem [shape: f32[32,16], index: 1, kind: input, shape index: {}]
  %s2 = inlined_call_operand.hbm [shape: f32[64,256], index: 2, kind: input, shape index: {}]
  %s3 = inlined_call_operand.vmem [shape: f32[1,256], index: 3, kind: input, shape index: {}]
  %s4 = inlined_call_operand.hbm [shape: f32[2,32,256], index: 4, kind: output, shape index: {}]
  %s5 = sld [smem:[#allocation0]]
  $region53: #{tpu_custom_call.1} parent=0
    _
  %s7 = ssub.s32 1, %s5
  %s8 = scalar_select 0, %s7, %s5
  $region1: #{tpu_custom_call.1} parent=0
    #allocation2 [shape = 'u8[65536]{0}', space=vmem, size = 0x10000, scoped, tag = 'input window, operand 2, single buffered']
    #allocation3 [shape = 's32[2]{0}', space=sflag, size = 0x8, scoped, tag = 'scoped memory for tpu_custom_call.1']
    #allocation4 [shape = 's32[2]{0}', space=sflag, size = 0x8, scoped, tag = 'scoped memory for tpu_custom_call.1']
    #allocation5 [shape = 'u8[65536]{0}', space=vmem, size = 0x10000, scoped, tag = 'output window, operand 0']
    %9 = vsyncpa [#allocation3], 0
    %10 = vsyncpa [#allocation4], 0
    %s11 = scalar_lea.sflag [#allocation4], 1
    %12 = vsyncpa %s11, 0
    loop: start=0, step=1, limit=4
    $region2: #{tpu_custom_call.1} parent=1 // loop_pre_header
      _
    $region3: #{tpu_custom_call.1} parent=1 // loop_header
      %s14 = sphi 0, %s18
      %p15 = scmp.ge.s32.totalorder %s14, 4
      %s21 = sphi 0, %s33
      %s22 = sphi 0, %s29
      %s23 = sphi 0, %s21
      %s24 = sphi 0, %s22
      %s25 = sphi 0, %s23
      %s26 = sphi 0, %s24
      %s36 = sphi 0, %s38
      %s39 = sphi 0, %s36
      %s40 = sphi 0, %s39
      %s56 = sphi 0, %s40
      %s62 = sphi 0, %s64
      %s65 = sphi 0, %s62
      %s66 = sphi 0, %s65
      %s82 = sphi 0, %s66
      %s86 = sphi 0, %s86
      %s88 = sphi 0, %s86
      %s89 = sphi 0, %s88
      %s103 = sphi 0, %s89
      %s107 = sphi 0, %s107
      %s109 = sphi 0, %s107
      %s110 = sphi 0, %s109
      %s124 = sphi 0, %s110
      %s132 = sphi 0, %s134
      %s135 = sphi 0, %s132
      %s136 = sphi 0, %s135
      %s152 = sphi 0, %s136
    $region4: #{tpu_custom_call.1} parent=1 // loop_header_branch
      %17 = sbr.rel (%p15) target = $region8
    $region5: #{tpu_custom_call.1} parent=1 // loop_body
      %s19 = ssub.s32 %s14, 1
      %s20 = ssub.s32 %s14, 2
      %s27 = sadd.s32 1, %s22
      %p28 = scmp.ge.s32.totalorder %s27, 1
      %s29 = scalar_select %p28, 0, %s27
      %s30 = sadd.s32 1, %s21
      %s31 = scalar_select %p28, %s30, %s21
      %p32 = scmp.ge.s32.totalorder %s31, 2
      %s33 = scalar_select %p32, 0, %s31
      %s34 = ssub.s32 %s21, %s33
      %p35 = scmp.eq.s32.totalorder %s34, 0
      %s37 = sadd.s32 %s36, 1
      %s38 = scalar_select %p35, %s36, %s37
      %p41 = pneg %p35
      %p42 = scmp.eq.s32.totalorder %s14, 1
      %p43 = por %p41, %p42
      %p44 = scmp.ne.s32.totalorder %s36, %s39
      %p45 = scmp.eq.s32.totalorder %s14, 0
      %p46 = por %p44, %p45
      %p47 = scmp.ne.s32.totalorder %s36, %s39
      %p48 = scmp.eq.s32.totalorder %s19, 1
      %p49 = por %p47, %p48
      %p50 = scmp.ne.s32.totalorder %s39, %s40
      %p51 = scmp.eq.s32.totalorder %s19, 0
      %p52 = por %p50, %p51
      %p53 = scmp.ne.s32.totalorder %s39, %s40
      %p54 = scmp.eq.s32.totalorder %s20, 1
      %p55 = por %p53, %p54
      %p57 = scmp.ne.s32.totalorder %s40, %s56
      %p58 = scmp.eq.s32.totalorder %s20, 0
      %p59 = por %p57, %p58
      %s60 = ssub.s32 %s22, %s29
      %p61 = scmp.eq.s32.totalorder %s60, 0
      %s63 = sadd.s32 %s62, 1
      %s64 = scalar_select %p61, %s62, %s63
      %p67 = pneg %p61
      %p68 = scmp.eq.s32.totalorder %s14, 1
      %p69 = por %p67, %p68
      %p70 = scmp.ne.s32.totalorder %s62, %s65
      %p71 = scmp.eq.s32.totalorder %s14, 0
      %p72 = por %p70, %p71
      %p73 = scmp.ne.s32.totalorder %s62, %s65
      %p74 = scmp.eq.s32.totalorder %s19, 1
      %p75 = por %p73, %p74
      %p76 = scmp.ne.s32.totalorder %s65, %s66
      %p77 = scmp.eq.s32.totalorder %s19, 0
      %p78 = por %p76, %p77
      %p79 = scmp.ne.s32.totalorder %s65, %s66
      %p80 = scmp.eq.s32.totalorder %s20, 1
      %p81 = por %p79, %p80
      %p83 = scmp.ne.s32.totalorder %s66, %s82
      %p84 = scmp.eq.s32.totalorder %s20, 0
      %p85 = por %p83, %p84
      %s87 = sadd.s32 %s86, 1
      %p90 = scmp.eq.s32.totalorder %s14, 1
      %p91 = scmp.ne.s32.totalorder %s86, %s88
      %p92 = scmp.eq.s32.totalorder %s14, 0
      %p93 = por %p91, %p92
      %p94 = scmp.ne.s32.totalorder %s86, %s88
      %p95 = scmp.eq.s32.totalorder %s19, 1
      %p96 = por %p94, %p95
      %p97 = scmp.ne.s32.totalorder %s88, %s89
      %p98 = scmp.eq.s32.totalorder %s19, 0
      %p99 = por %p97, %p98
      %p100 = scmp.ne.s32.totalorder %s88, %s89
      %p101 = scmp.eq.s32.totalorder %s20, 1
      %p102 = por %p100, %p101
      %p104 = scmp.ne.s32.totalorder %s89, %s103
      %p105 = scmp.eq.s32.totalorder %s20, 0
      %p106 = por %p104, %p105
      %s108 = sadd.s32 %s107, 1
      %p111 = scmp.eq.s32.totalorder %s14, 1
      %p112 = scmp.ne.s32.totalorder %s107, %s109
      %p113 = scmp.eq.s32.totalorder %s14, 0
      %p114 = por %p112, %p113
      %p115 = scmp.ne.s32.totalorder %s107, %s109
      %p116 = scmp.eq.s32.totalorder %s19, 1
      %p117 = por %p115, %p116
      %p118 = scmp.ne.s32.totalorder %s109, %s110
      %p119 = scmp.eq.s32.totalorder %s19, 0
      %p120 = por %p118, %p119
      %p121 = scmp.ne.s32.totalorder %s109, %s110
      %p122 = scmp.eq.s32.totalorder %s20, 1
      %p123 = por %p121, %p122
      %p125 = scmp.ne.s32.totalorder %s110, %s124
      %p126 = scmp.eq.s32.totalorder %s20, 0
      %p127 = por %p125, %p126
      %s128 = ssub.s32 %s21, %s33
      %s129 = ssub.s32 %s22, %s29
      %s130 = sor.u32 %s128, %s129
      %p131 = scmp.eq.s32.totalorder %s130, 0
      %s133 = sadd.s32 %s132, 1
      %s134 = scalar_select %p131, %s132, %s133
      %p137 = pneg %p131
      %p138 = scmp.eq.s32.totalorder %s14, 1
      %p139 = por %p137, %p138
      %p140 = scmp.ne.s32.totalorder %s132, %s135
      %p141 = scmp.eq.s32.totalorder %s14, 0
      %p142 = por %p140, %p141
      %p143 = scmp.ne.s32.totalorder %s132, %s135
      %p144 = scmp.eq.s32.totalorder %s19, 1
      %p145 = por %p143, %p144
      %p146 = scmp.ne.s32.totalorder %s135, %s136
      %p147 = scmp.eq.s32.totalorder %s19, 0
      %p148 = por %p146, %p147
      %p149 = scmp.ne.s32.totalorder %s135, %s136
      %p150 = scmp.eq.s32.totalorder %s20, 1
      %p151 = por %p149, %p150
      %p153 = scmp.ne.s32.totalorder %s136, %s152
      %p154 = scmp.eq.s32.totalorder %s20, 0
      %p155 = por %p153, %p154
      %p156 = scmp.le.s32.totalorder 1, %s14
      %p157 = scmp.lt.s32.totalorder %s14, 3
      %p158 = pnand %p156, %p157
      %p159 = pneg %p158
      // Predicated region
      $region9: #{tpu_custom_call.1} parent=5 // pred_check
        _
      $region10: #{tpu_custom_call.1} parent=5 // pred_check_branch
        %161 = sbr.rel (%p158) target = $region12
      $region11: #{tpu_custom_call.1} parent=5 // pred_region
        %s162 = ssub.s32 %s14, 1
        // Predicated region
        $region13: #{tpu_custom_call.1} parent=11 // pred_check
          %p163 = pneg %p78
        $region14: #{tpu_custom_call.1} parent=11 // pred_check_branch
          %165 = sbr.rel (%p163) target = $region16
        $region15: #{tpu_custom_call.1} parent=11 // pred_region
          %s166 = smul.u32 4, %s24
          %p167 = scmp.lt.s32.totalorder %s166, 3
          %s168 = scalar_select %p167, %s166, 3
          %s169 = smul.addr %s168, 8
          %s170 = scalar_lea.vmem %s1, %s169
          %s171 = smul.u32 4, %s24
        $region16: #{tpu_custom_call.1} parent=11 // pred_fallthru
          _
        // Predicated region
        $region17: #{tpu_custom_call.1} parent=11 // pred_check
          %p172 = pneg %p99
        $region18: #{tpu_custom_call.1} parent=11 // pred_check_branch
          %174 = sbr.rel (%p172) target = $region20
        $region19: #{tpu_custom_call.1} parent=11 // pred_region
          %176 = vsyncadd [#allocation3], 0
          %s177 = sshll.u32 %s2, 4
          %s178 = int_to_ptr.hbm [resolvable:$true] %s177
          %s179 = sshll.u32 [#allocation2], 4
          %s180 = int_to_ptr.vmem [resolvable:$true] %s179
          %185 = dma.hbm_to_vmem [thread:$0]  %s178, 2048, %s180, [#allocation3], 256, 256, 16
        $region20: #{tpu_custom_call.1} parent=11 // pred_fallthru
          _
        // Predicated region
        $region21: #{tpu_custom_call.1} parent=11 // pred_check
          %p186 = pneg %p120
        $region22: #{tpu_custom_call.1} parent=11 // pred_check_branch
          %188 = sbr.rel (%p186) target = $region24
        $region23: #{tpu_custom_call.1} parent=11 // pred_region
          _
        $region24: #{tpu_custom_call.1} parent=11 // pred_fallthru
          _
      $region12: #{tpu_custom_call.1} parent=5 // pred_fallthru
        _
      %p189 = scmp.lt.s32.totalorder %s14, 2
      // Predicated region
      $region25: #{tpu_custom_call.1} parent=5 // pred_check
        %p190 = pneg %p189
      $region26: #{tpu_custom_call.1} parent=5 // pred_check_branch
        %192 = sbr.rel (%p190) target = $region28
      $region27: #{tpu_custom_call.1} parent=5 // pred_region
        // Predicated region
        $region29: #{tpu_custom_call.1} parent=27 // pred_check
          %p193 = pneg %p46
        $region30: #{tpu_custom_call.1} parent=27 // pred_check_branch
          %195 = sbr.rel (%p193) target = $region32
        $region31: #{tpu_custom_call.1} parent=27 // pred_region
          %p196 = scmp.lt.s32.totalorder %s21, 1
          %s197 = scalar_select %p196, %s21, 1
          %s198 = smul.addr %s197, 2
          %s199 = smul.addr %s198, 8
          %s200 = scalar_lea.vmem %s0, %s199
        $region32: #{tpu_custom_call.1} parent=27 // pred_fallthru
          _
      $region28: #{tpu_custom_call.1} parent=5 // pred_fallthru
        _
      %p201 = scmp.le.s32.totalorder 1, %s14
      %p202 = scmp.lt.s32.totalorder %s14, 3
      %p203 = pnand %p201, %p202
      %p204 = pneg %p203
      // Predicated region
      $region33: #{tpu_custom_call.1} parent=5 // pred_check
        _
      $region34: #{tpu_custom_call.1} parent=5 // pred_check_branch
        %206 = sbr.rel (%p203) target = $region36
      $region35: #{tpu_custom_call.1} parent=5 // pred_region
        %s207 = ssub.s32 %s14, 1
        // Predicated region
        $region37: #{tpu_custom_call.1} parent=35 // pred_check
          %p208 = pneg %p99
        $region38: #{tpu_custom_call.1} parent=35 // pred_check_branch
          %210 = sbr.rel (%p208) target = $region40
        $region39: #{tpu_custom_call.1} parent=35 // pred_region
          %212 = dma.done [#allocation3], 2048
        $region40: #{tpu_custom_call.1} parent=35 // pred_fallthru
          _
        %p213 = scmp.lt.s32.totalorder %s23, 1
        %s214 = scalar_select %p213, %s23, 1
        %s215 = smul.addr %s214, 2
        %s216 = smul.addr %s215, 8
        %s217 = scalar_lea.vmem %s0, %s216
        %p218 = pneg %p52
        %p219 = pneg %p49
        %s220 = smul.u32 4, %s24
        %p221 = scmp.lt.s32.totalorder %s220, 3
        %s222 = scalar_select %p221, %s220, 3
        %s223 = smul.addr %s222, 8
        %s224 = scalar_lea.vmem %s1, %s223
        %p225 = pneg %p78
        %p226 = pneg %p75
        %p227 = pneg %p99
        %p228 = pneg %p96
        %p229 = pneg %p120
        %p230 = pneg %p117
        %p231 = pneg %p148
        %p232 = pneg %p145
        %s233 = sand.u32 %s135, 1
        %s234 = scalar_lea.sflag [#allocation4], %s233
        %s235 = sand.u32 %s135, 1
        %s236 = smul.addr %s235, 64
        %s237 = scalar_lea.vmem [#allocation5], %s236
        %p238 = scmp.lt.s32.totalorder %s23, 1
        %s239 = scalar_select %p238, %s23, 1
        %s240 = smul.addr %s239, 2
        %s241 = smul.addr %s240, 8
        %s242 = scalar_lea.vmem %s0, %s241
        %s243 = smul.u32 4, %s24
        %p244 = scmp.lt.s32.totalorder %s243, 3
        %s245 = scalar_select %p244, %s243, 3
        %s246 = smul.addr %s245, 8
        %s247 = scalar_lea.vmem %s1, %s246
        %s248 = smul.u32 4, %s24
        %s249 = smul.u32 4, %s24
        %v250 = vld [vmem:[%s242] sm:$0xff]
        %v251 = vld [vmem:[%s242 + $0x8] sm:$0xff]
        %v252 = vld [vmem:[%s247] sm:$0xff]
        %v253 = vld [vmem:[%s247 + $0x8] sm:$0xff]
        %v254 = vld [vmem:[%s247 + $0x10] sm:$0xff]
        %v255 = vld [vmem:[%s247 + $0x18] sm:$0xff]
        %vm256 = vcmask 130048
        %v258 = vsel %vm256, %v252, 0
        %v261 = vsel %vm256, %v253, 0
        %v264 = vsel %vm256, %v254, 0
        %v267 = vsel %vm256, %v255, 0
        %269 = vmatpush.msra.mxu0 0.0
        %270 = vmatpush.msra.mxu0 0.0
        %271 = vmatpush.msra.mxu0 0.0
        %272 = vmatpush.msra.mxu0 0.0
        %273 = vmatpush.msra.mxu0 0.0
        %274 = vmatpush.msra.mxu0 0.0
        %275 = vmatpush.msra.mxu0 0.0
        %276 = vmatpush.msra.mxu0 0.0
        %277 = vmatpush.msra.mxu0 0.0
        %278 = vmatpush.msra.mxu0 0.0
        %279 = vmatpush.msra.mxu0 0.0
        %280 = vmatpush.msra.mxu0 0.0
        %281 = vmatpush.msra.mxu0 0.0
        %282 = vmatpush.msra.mxu0 0.0
        %283 = vmatpush.msra.mxu0 %v251
        %284 = vmatpush.msra.mxu0 %v250
        %285 = vmatmul.f32.gmra.mxu0 %v258
        %v286 = vpop.f32.mrf.mxu0
        %v287 = vadd.f32 0.0, %v286
        %288 = vmatmul.f32.gmra.mxu0 %v261
        %v289 = vpop.f32.mrf.mxu0
        %v290 = vadd.f32 0.0, %v289
        %291 = vmatmul.f32.gmra.mxu0 %v264
        %v292 = vpop.f32.mrf.mxu0
        %v293 = vadd.f32 0.0, %v292
        %294 = vmatmul.f32.gmra.mxu0 %v267
        %v295 = vpop.f32.mrf.mxu0
        %v296 = vadd.f32 0.0, %v295
        %297 = vdwg.mxu0
        %v298 = vld [vmem:[#allocation2] sm:$0xff]
        %v299 = vld [vmem:[#allocation2 + $0x8] sm:$0xff]
        %v300 = vld [vmem:[#allocation2 + $0x10] sm:$0xff]
        %v301 = vld [vmem:[#allocation2 + $0x18] sm:$0xff]
        %v302 = vld [vmem:[#allocation2 + $0x20] sm:$0xff]
        %v303 = vld [vmem:[#allocation2 + $0x28] sm:$0xff]
        %v304 = vld [vmem:[#allocation2 + $0x30] sm:$0xff]
        %v305 = vld [vmem:[#allocation2 + $0x38] sm:$0xff]
        %v306 = vld [vmem:[#allocation2 + $0x40] sm:$0xff]
        %v307 = vld [vmem:[#allocation2 + $0x48] sm:$0xff]
        %v308 = vld [vmem:[#allocation2 + $0x50] sm:$0xff]
        %v309 = vld [vmem:[#allocation2 + $0x58] sm:$0xff]
        %v310 = vld [vmem:[#allocation2 + $0x60] sm:$0xff]
        %v311 = vld [vmem:[#allocation2 + $0x68] sm:$0xff]
        %v312 = vld [vmem:[#allocation2 + $0x70] sm:$0xff]
        %v313 = vld [vmem:[#allocation2 + $0x78] sm:$0xff]
        %v314 = vld [vmem:[%s3] sm:$0x3]
        %v316 = vperm.slane %v314, 0
        %v317 = vperm.slane %v314, 1
        %vm320 = vcmask 523264
        %v322 = vsel %vm320, %v287, 0
        %v325 = vsel %vm320, %v290, 0
        %v328 = vsel %vm320, %v293, 0
        %v331 = vsel %vm320, %v296, 0
        %333 = vmatpush.msra.mxu0 0.0
        %334 = vmatpush.msra.mxu0 0.0
        %335 = vmatpush.msra.mxu0 0.0
        %336 = vmatpush.msra.mxu0 0.0
        %337 = vmatpush.msra.mxu0 0.0
        %338 = vmatpush.msra.mxu0 0.0
        %339 = vmatpush.msra.mxu0 0.0
        %340 = vmatpush.msra.mxu0 0.0
        %341 = vmatpush.msra.mxu0 %v312
        %342 = vmatpush.msra.mxu0 %v310
        %343 = vmatpush.msra.mxu0 %v308
        %344 = vmatpush.msra.mxu0 %v306
        %345 = vmatpush.msra.mxu0 %v304
        %346 = vmatpush.msra.mxu0 %v302
        %347 = vmatpush.msra.mxu0 %v300
        %348 = vmatpush.msra.mxu0 %v298
        %349 = vmatmul.f32.gmra.mxu0 %v322
        %v350 = vpop.f32.mrf.mxu0
        %v351 = vadd.f32 %v316, %v350
        %352 = vmatmul.f32.gmra.mxu0 %v325
        %v353 = vpop.f32.mrf.mxu0
        %v354 = vadd.f32 %v316, %v353
        %355 = vmatmul.f32.gmra.mxu0 %v328
        %v356 = vpop.f32.mrf.mxu0
        %v357 = vadd.f32 %v316, %v356
        %358 = vmatmul.f32.gmra.mxu0 %v331
        %v359 = vpop.f32.mrf.mxu0
        %v360 = vadd.f32 %v316, %v359
        %361 = vdwg.mxu0
        %362 = vmatpush.msra.mxu0 0.0
        %363 = vmatpush.msra.mxu0 0.0
        %364 = vmatpush.msra.mxu0 0.0
        %365 = vmatpush.msra.mxu0 0.0
        %366 = vmatpush.msra.mxu0 0.0
        %367 = vmatpush.msra.mxu0 0.0
        %368 = vmatpush.msra.mxu0 0.0
        %369 = vmatpush.msra.mxu0 0.0
        %370 = vmatpush.msra.mxu0 %v313
        %371 = vmatpush.msra.mxu0 %v311
        %372 = vmatpush.msra.mxu0 %v309
        %373 = vmatpush.msra.mxu0 %v307
        %374 = vmatpush.msra.mxu0 %v305
        %375 = vmatpush.msra.mxu0 %v303
        %376 = vmatpush.msra.mxu0 %v301
        %377 = vmatpush.msra.mxu0 %v299
        %378 = vmatmul.f32.gmra.mxu0 %v322
        %v379 = vpop.f32.mrf.mxu0
        %v380 = vadd.f32 %v317, %v379
        %381 = vmatmul.f32.gmra.mxu0 %v325
        %v382 = vpop.f32.mrf.mxu0
        %v383 = vadd.f32 %v317, %v382
        %384 = vmatmul.f32.gmra.mxu0 %v328
        %v385 = vpop.f32.mrf.mxu0
        %v386 = vadd.f32 %v317, %v385
        %387 = vmatmul.f32.gmra.mxu0 %v331
        %v388 = vpop.f32.mrf.mxu0
        %v389 = vadd.f32 %v317, %v388
        %390 = vdwg.mxu0
        %391 = vst [vmem:[%s237] sm:$0xff] %v351
        %392 = vst [vmem:[%s237 + $0x8] sm:$0xff] %v380
        %393 = vst [vmem:[%s237 + $0x10] sm:$0xff] %v354
        %394 = vst [vmem:[%s237 + $0x18] sm:$0xff] %v383
        %395 = vst [vmem:[%s237 + $0x20] sm:$0xff] %v357
        %396 = vst [vmem:[%s237 + $0x28] sm:$0xff] %v386
        %397 = vst [vmem:[%s237 + $0x30] sm:$0xff] %v360
        %398 = vst [vmem:[%s237 + $0x38] sm:$0xff] %v389
        %s399 = sand.u32 %s135, 1
        %s400 = scalar_lea.sflag [#allocation4], %s399
        %s401 = sand.u32 %s135, 1
        %s402 = smul.addr %s401, 64
        %s403 = scalar_lea.vmem [#allocation5], %s402
        // Predicated region
        $region41: #{tpu_custom_call.1} parent=35 // pred_check
          %p404 = pneg %p145
        $region42: #{tpu_custom_call.1} parent=35 // pred_check_branch
          %406 = sbr.rel (%p404) target = $region44
        $region43: #{tpu_custom_call.1} parent=35 // pred_region
          %s407 = smul.u32 4, %s24
          %409 = vsyncadd %s400, 0
          %s410 = smul.addr %s407, 2
          %s411 = smul.addr %s23, 8
          %s412 = sadd.s32 %s410, %s411
          %s413 = smul.addr %s412, 8
          %s414 = scalar_lea.hbm %s4, %s413
          %s415 = sshll.u32 %s403, 4
          %s416 = int_to_ptr.vmem [resolvable:$true] %s415
          %s417 = sshll.u32 %s414, 4
          %s418 = int_to_ptr.hbm [resolvable:$true] %s417
          %423 = dma.vmem_to_hbm [thread:$0]  %s416, 1024, %s418, %s400, 256, 256, 16
        $region44: #{tpu_custom_call.1} parent=35 // pred_fallthru
          _
      $region36: #{tpu_custom_call.1} parent=5 // pred_fallthru
        _
      %p424 = scmp.le.s32.totalorder 2, %s14
      // Predicated region
      $region45: #{tpu_custom_call.1} parent=5 // pred_check
        %p425 = pneg %p424
      $region46: #{tpu_custom_call.1} parent=5 // pred_check_branch
        %427 = sbr.rel (%p425) target = $region48
      $region47: #{tpu_custom_call.1} parent=5 // pred_region
        %s428 = ssub.s32 %s14, 2
        // Predicated region
        $region49: #{tpu_custom_call.1} parent=47 // pred_check
          %p429 = pneg %p151
        $region50: #{tpu_custom_call.1} parent=47 // pred_check_branch
          %431 = sbr.rel (%p429) target = $region52
        $region51: #{tpu_custom_call.1} parent=47 // pred_region
          %s432 = sand.u32 %s136, 1
          %s433 = scalar_lea.sflag [#allocation4], %s432
          %s434 = sand.u32 %s136, 1
          %s435 = smul.addr %s434, 64
          %s436 = scalar_lea.vmem [#allocation5], %s435
          %438 = dma.done %s433, 1024
        $region52: #{tpu_custom_call.1} parent=47 // pred_fallthru
          _
      $region48: #{tpu_custom_call.1} parent=5 // pred_fallthru
        _
    $region6: #{tpu_custom_call.1} parent=1 // loop_footer
      %s18 = sadd.s32 1, %s14
    $region7: #{tpu_custom_call.1} parent=1 // loop_footer_branch
      %13 = sbr.rel target = $region3
    $region8: #{tpu_custom_call.1} parent=1 // loop_exit
      _
    %439 = vsyncpa [#allocation3], 1
    %s440 = scalar_lea.sflag [#allocation3], 1
    %441 = vsyncpa %s440, 1
    %442 = vsyncpa [#allocation4], 1
    %s443 = scalar_lea.sflag [#allocation4], 1
    %444 = vsyncpa %s443, 1

</llo_original>
